<compile_context>
chip_gen: v7x
topology: tpu7x:2x2x1
jax: 0.10.0
libtpu: 0.0.40
codegen_flags: <defaults>
</compile_context>

<pallas_src>
import math
import numpy as np
import jax
import jax.numpy as jnp
from jax.experimental import pallas as pl
from jax.experimental.pallas import tpu as pltpu


# ----------------------------------------------------------------------------
# Kernel: weighted cross-entropy partial sums over one (sample, spatial stripe).
#   acc[0, 0, :] += w[y_p] * (-log softmax(x_p)[y_p])   (per lane / pixel slot)
#   acc[0, 1, :] += w[y_p]
# At the last spatial step the accumulator is lane-reduced and the two totals
# are lane-broadcast into a (1, 2, 128) output block (unmasked vst).
# Final  main_loss = sum(num) / sum(den)  is a tiny XLA reduce in the wrapper.
# ----------------------------------------------------------------------------
def _weighted_ce_kernel(w_ref, logits_ref, onehot_ref, out_ref, acc_ref):
    # w_ref:      (1, C, 128)      class weights, lane-dense (only lane 0 used)
    # logits_ref: (1, C, tile_hw)  NCHW-native block: classes on sublanes,
    # onehot_ref: (1, C, tile_hw)  spatial positions on lanes.
    # out_ref:    (1, 2, 128)      per-(n, p) totals, written at the last step.
    # acc_ref:    (1, 2, tile_hw)  VMEM scratch: sublane 0 = num, 1 = den.
    j = pl.program_id(2)

    @pl.when(j == 0)
    def _():
        acc_ref[...] = jnp.zeros_like(acc_ref)

    x = logits_ref[...].astype(jnp.float32)            # (1, C, T)
    t = onehot_ref[...].astype(jnp.float32)            # (1, C, T) strict one-hot
    w = w_ref[...].astype(jnp.float32)[:, :, 0:1]      # (1, C, 1)

    # log-sum-exp over the (small) class axis -> (1, 1, T)
    m = jnp.max(x, axis=1, keepdims=True)
    lse = jnp.log(jnp.sum(jnp.exp(x - m), axis=1, keepdims=True)) + m

    # Selected logit and selected class weight via the one-hot (no (T, C)
    # nll temporary is materialised).
    x_y = jnp.sum(t * x, axis=1, keepdims=True)        # (1, 1, T)
    w_y = jnp.sum(t * w, axis=1, keepdims=True)        # (1, 1, T)

    acc_ref[:, 0:1, :] += w_y * (lse - x_y)
    acc_ref[:, 1:2, :] += w_y

    @pl.when(j == pl.num_programs(2) - 1)
    def _():
        sums = jnp.sum(acc_ref[...], axis=-1, keepdims=True)    # (1, 2, 1)
        out_ref[...] = jnp.broadcast_to(sums, (1, 2, 128))


# ----------------------------------------------------------------------------
# Tiling helpers (VMEM-accurate, generation-aware).
# ----------------------------------------------------------------------------
def _round_up(x, m):
    return ((x + m - 1) // m) * m


def _ceil_div(a, b):
    return -(-a // b)


def _sublane_padded_rows(c, dtype):
    """Physical sublane rows occupied by a length-c second-minor axis."""
    itemsize = jnp.dtype(dtype).itemsize
    granule = 8 * max(1, 4 // itemsize)      # 8 (f32) / 16 (bf16) / 32 (int8)
    return _round_up(max(int(c), 1), granule)


def _vmem_capacity_bytes():
    try:
        cap = getattr(pltpu.get_tpu_info(), "vmem_capacity_bytes", None)
        if cap:
            return int(cap)
    except Exception:
        pass
    return 64 << 20                          # conservative default (v7x)


def _choose_tiling(hw, c, n, logits_dtype, target_dtype, max_tile_elems=None):
    """Return (tile_hw, n_tiles, p_par, j_tiles, hw_pad, vmem_limit_bytes)."""
    cap = _vmem_capacity_bytes()
    budget = min(cap // 2, 64 << 20)         # ~32 MiB on v7x, up to 64 MiB v5e/v6e

    # Physical VMEM bytes per spatial element of the pipeline working set:
    # 2 pipeline buffers per input (sublane-padded) + (1, 2, T) f32 accumulator
    # (padded to 8 sublanes).
    per_elem = 8 * 4
    for dt in (logits_dtype, target_dtype):
        per_elem += 2 * _sublane_padded_rows(c, dt) * jnp.dtype(dt).itemsize
    fixed = 2 * 8 * 128 * 4                  # weights block + output block

    hw128 = _round_up(hw, 128)
    max_tile = max(128, ((budget - fixed) // per_elem // 128) * 128)
    if max_tile_elems is not None:
        max_tile = max(128, min(max_tile, _round_up(int(max_tile_elems), 128)))

    if max_tile >= hw128:
        tile_hw = hw128
    else:
        # Prefer a 128-multiple divisor of hw128 (no spatial zero-padding).
        tile_hw = 0
        t = max_tile
        lo = max(128, max_tile // 4)
        while t >= lo:
            if hw128 % t == 0:
                tile_hw = t
                break
            t -= 128
        if tile_hw == 0:
            # No good divisor under the budget: balance tiles, zero-pad the tail.
            n_t = _ceil_div(hw128, max_tile)
            tile_hw = _round_up(_ceil_div(hw128, n_t), 128)
    n_tiles = _ceil_div(hw128, tile_hw)
    hw_pad = n_tiles * tile_hw

    # Second *parallel* grid axis over space so both v7x TensorCores stay busy
    # when the sample axis alone would leave one idle (N == 1 / odd N).
    p_par = 2 if (n % 2 == 1 and n_tiles % 2 == 0) else 1
    j_tiles = n_tiles // p_par

    vmem_limit = int(min(cap, max(32 << 20,
                                  fixed + per_elem * tile_hw + (8 << 20))))
    return tile_hw, n_tiles, p_par, j_tiles, hw_pad, vmem_limit


# ----------------------------------------------------------------------------
# Wrapper.
# ----------------------------------------------------------------------------
def unet_loss_with_angle(seg_logits, seg_target, angle_pred, angle_target,
                         class_weights, *, _max_tile_elems=None):
    """Pallas implementation of UnetLoss_with_angle.forward.

    seg_logits:   (N, C, H, W) float (f32 or bf16)          -> input[0]
    seg_target:   (N, C, H, W) strict one-hot (any dtype)   -> target
    angle_pred:   (N, 2) float                               -> input[1]
    angle_target: (N,)   float                               -> angle_target
    class_weights:(C,)   float                               -> module weights
    """
    N, C, H, W = seg_logits.shape
    HW = H * W

    tile_hw, n_tiles, p_par, j_tiles, hw_pad, vmem_limit = _choose_tiling(
        HW, C, N, seg_logits.dtype, seg_target.dtype, _max_tile_elems)

    # Free, contiguous reshapes (no transpose).  Inputs stay in their native
    # dtype (bf16 logits / int8 one-hot are fine); casting happens in vregs.
    logits3d = seg_logits.reshape(N, C, HW)
    target3d = seg_target.reshape(N, C, HW)
    if hw_pad != HW:
        # Zero-pad the flattened spatial axis: all-zero one-hot columns give
        # w_y == 0 and finite lse, so they contribute exactly 0 to num and den.
        pad = ((0, 0), (0, 0), (0, hw_pad - HW))
        logits3d = jnp.pad(logits3d, pad)
        target3d = jnp.pad(target3d, pad)

    # Lane-dense class-weight block (avoids a degenerate 1-lane VMEM block).
    w_b = jnp.broadcast_to(
        class_weights.astype(jnp.float32).reshape(1, C, 1), (1, C, 128))

    def _spatial_map(n_idx, p_idx, j_idx):
        return (n_idx, 0, p_idx * j_tiles + j_idx)

    def _out_map(n_idx, p_idx, j_idx):
        return (n_idx * p_par + p_idx, 0, 0)

    totals = pl.pallas_call(
        _weighted_ce_kernel,
        out_shape=jax.ShapeDtypeStruct((N * p_par, 2, 128), jnp.float32),
        grid_spec=pltpu.PrefetchScalarGridSpec(
            num_scalar_prefetch=0,
            grid=(N, p_par, j_tiles),
            in_specs=[
                pl.BlockSpec((1, C, 128), lambda n, p, j: (0, 0, 0)),
                pl.BlockSpec((1, C, tile_hw), _spatial_map),
                pl.BlockSpec((1, C, tile_hw), _spatial_map),
            ],
            out_specs=pl.BlockSpec((1, 2, 128), _out_map),
            scratch_shapes=[pltpu.VMEM((1, 2, tile_hw), jnp.float32)]),
        compiler_params=pltpu.CompilerParams(
            dimension_semantics=("parallel", "parallel", "arbitrary"),
            vmem_limit_bytes=vmem_limit),
    )(w_b, logits3d, target3d)

    # Tiny final reduce (N * p_par * 2 scalars) — reads only lane 0.
    main_loss = jnp.sum(totals[:, 0, 0]) / jnp.sum(totals[:, 1, 0])

    # AngleLoss: only N*2 floats — plain-JAX glue (arccos has no guaranteed
    # Mosaic lowering; a dedicated pallas_call costs more than the compute).
    # NOTE: pi / 181.0 matches the original module (intentionally not /180).
    ang = angle_target.astype(jnp.float32) * (math.pi / 181.0)
    tvec = jnp.stack([jnp.cos(ang), jnp.sin(ang)], axis=1)            # (N, 2)
    v = angle_pred.astype(jnp.float32)
    # Matches the reference/PyTorch: zero-norm rows produce NaN (no epsilon).
    v = v / jnp.linalg.norm(v, axis=1, keepdims=True)
    d = jnp.clip(jnp.sum(v * tvec, axis=1), -1.0 + 1e-6, 1.0 - 1e-6)
    agl_loss = jnp.mean(jnp.arccos(d))

    return main_loss + 0.5 * agl_loss


# ----------------------------------------------------------------------------
# Pure-JAX reference (mirrors the PyTorch semantics) for correctness checks.
# ----------------------------------------------------------------------------
def _reference_loss(seg_logits, seg_target, angle_pred, angle_target, w):
    N, C, H, W = seg_logits.shape
    logits = jnp.transpose(seg_logits, (0, 2, 3, 1)).reshape(-1, C)
    tgt = jnp.transpose(seg_target, (0, 2, 3, 1)).reshape(-1, C)
    y = jnp.argmax(tgt, axis=1)
    logp = jax.nn.log_softmax(logits, axis=-1)
    nll = -jnp.take_along_axis(logp, y[:, None], axis=1)[:, 0]
    wy = w[y]
    main = jnp.sum(wy * nll) / jnp.sum(wy)

    ang = angle_target.astype(jnp.float32) * (math.pi / 181.0)
    tvec = jnp.stack([jnp.cos(ang), jnp.sin(ang)], axis=1)
    v = angle_pred / jnp.linalg.norm(angle_pred, axis=1, keepdims=True)
    d = jnp.clip(jnp.sum(v * tvec, axis=1), -1.0 + 1e-6, 1.0 - 1e-6)
    agl = jnp.mean(jnp.arccos(d))
    return main + 0.5 * agl


if __name__ == "__main__":
    loss_fn = jax.jit(unet_loss_with_angle, static_argnames=("_max_tile_elems",))

    def _make_case(key, n, c, h, w, logits_dtype=jnp.float32,
                   onehot_dtype=jnp.float32):
        k1, k2, k3, k4 = jax.random.split(key, 4)
        weights = jnp.asarray(np.linspace(0.5, 2.0, c), dtype=jnp.float32)
        logits = jax.random.normal(k1, (n, c, h, w),
                                   dtype=jnp.float32).astype(logits_dtype)
        idx = jax.random.randint(k2, (n, h, w), 0, c)
        onehot = jax.nn.one_hot(idx, c, axis=1, dtype=onehot_dtype)  # (n,c,h,w)
        apred = jax.random.normal(k3, (n, 2), dtype=jnp.float32)
        atgt = jax.random.uniform(k4, (n,), minval=0.0, maxval=181.0,
                                  dtype=jnp.float32)
        return logits, onehot, apred, atgt, weights

    key = jax.random.PRNGKey(0)
    k1, k2, k3 = jax.random.split(key, 3)

    cases = [
        # case 1: the module's nominal small shapes (single tile, no padding).
        (_make_case(k1, 2, 4, 16, 16), None),
        # case 2: N=1 + forced small tiles -> multi-tile in-kernel reduction and
        #         the 2-way spatial-parallel axis; bf16 logits + int8 one-hot.
        (_make_case(k2, 1, 4, 16, 16, logits_dtype=jnp.bfloat16,
                    onehot_dtype=jnp.int8), 128),
        # case 3: H*W = 324 (not a multiple of 128) and C=3 -> zero-padding path
        #         + sublane-padded class axis.
        (_make_case(k3, 2, 3, 18, 18), 128),
    ]

    for (logits, onehot, apred, atgt, wts), max_tile in cases:
        out = jax.block_until_ready(
            loss_fn(logits, onehot, apred, atgt, wts, _max_tile_elems=max_tile))
        ref = jax.block_until_ready(
            _reference_loss(logits.astype(jnp.float32),
                            onehot.astype(jnp.float32), apred, atgt, wts))
        np.testing.assert_allclose(np.asarray(out), np.asarray(ref),
                                   rtol=1e-5, atol=1e-5)

    print("KERNEL_OK")
</pallas_src>

<mosaic_0001>
module attributes {stable_mosaic.version = 11 : i64} {
  func.func @_weighted_ce_kernel(%arg0: i32, %arg1: i32, %arg2: i32, %arg3: memref<1x4x128xf32, #tpu.memory_space<vmem>>, %arg4: memref<1x4x256xf32, #tpu.memory_space<vmem>>, %arg5: memref<1x4x256xf32, #tpu.memory_space<vmem>>, %arg6: memref<1x2x128xf32, #tpu.memory_space<vmem>>, %arg7: memref<1x2x256xf32, #tpu.memory_space<vmem>>) attributes {dimension_semantics = [#tpu.dimension_semantics<parallel>, #tpu.dimension_semantics<parallel>, #tpu.dimension_semantics<arbitrary>], iteration_bounds = array<i64: 2, 1, 1>, scalar_prefetch = 0 : i64, scratch_operands = 1 : i64, tpu.core_type = #tpu.core_type<tc>, window_params = [{pipeline_mode = #tpu.pipeline_mode<synchronous>, transform_indices = @transform_0, window_bounds = array<i64: 1, 4, 128>}, {transform_indices = @transform_1, window_bounds = array<i64: 1, 4, 256>}, {transform_indices = @transform_2, window_bounds = array<i64: 1, 4, 256>}, {transform_indices = @transform_3, window_bounds = array<i64: 1, 2, 128>}]} {
    %c0_i32 = arith.constant 0 : i32
    %0 = arith.cmpi eq, %arg2, %c0_i32 : i32
    %1 = arith.extui %0 : i1 to i32
    %c0_i32_0 = arith.constant 0 : i32
    %2 = arith.cmpi ne, %1, %c0_i32_0 : i32
    scf.if %2 {
      %cst_25 = arith.constant 0.000000e+00 : f32
      %34 = vector.broadcast %cst_25 : f32 to vector<1x2x256xf32>
      %c0_26 = arith.constant 0 : index
      %c0_27 = arith.constant 0 : index
      %c0_28 = arith.constant 0 : index
      %35 = vector.load %arg7[%c0_26, %c0_27, %c0_28] : memref<1x2x256xf32, #tpu.memory_space<vmem>>, vector<1x2x256xf32>
      tpu.vector_store %arg7[%c0_26, %c0_27, %c0_28], %34 {strides = array<i32>} : memref<1x2x256xf32, #tpu.memory_space<vmem>>, vector<1x2x256xf32>,
    } else {
    }
    %c0 = arith.constant 0 : index
    %c0_1 = arith.constant 0 : index
    %c0_2 = arith.constant 0 : index
    %3 = vector.load %arg4[%c0, %c0_1, %c0_2] : memref<1x4x256xf32, #tpu.memory_space<vmem>>, vector<1x4x256xf32>
    %c0_3 = arith.constant 0 : index
    %c0_4 = arith.constant 0 : index
    %c0_5 = arith.constant 0 : index
    %4 = vector.load %arg5[%c0_3, %c0_4, %c0_5] : memref<1x4x256xf32, #tpu.memory_space<vmem>>, vector<1x4x256xf32>
    %c0_6 = arith.constant 0 : index
    %c0_7 = arith.constant 0 : index
    %c0_8 = arith.constant 0 : index
    %5 = vector.load %arg3[%c0_6, %c0_7, %c0_8] : memref<1x4x128xf32, #tpu.memory_space<vmem>>, vector<1x4x128xf32>
    %6 = vector.extract_strided_slice %5 {offsets = [0, 0, 0], sizes = [1, 4, 1], strides = [1, 1, 1]} : vector<1x4x128xf32> to vector<1x4x1xf32>
    %cst = arith.constant dense<0xFF800000> : vector<1x256xf32>
    %7 = vector.multi_reduction <maximumf>, %3, %cst [1] : vector<1x4x256xf32> to vector<1x256xf32>
    %8 = vector.shape_cast %7 : vector<1x256xf32> to vector<1x1x256xf32>
    %9 = vector.broadcast %8 : vector<1x1x256xf32> to vector<1x4x256xf32>
    %10 = arith.subf %3, %9 : vector<1x4x256xf32>
    %11 = math.exp %10 : vector<1x4x256xf32>
    %cst_9 = arith.constant dense<0.000000e+00> : vector<1x256xf32>
    %12 = vector.multi_reduction <add>, %11, %cst_9 [1] : vector<1x4x256xf32> to vector<1x256xf32>
    %13 = vector.shape_cast %12 : vector<1x256xf32> to vector<1x1x256xf32>
    %14 = math.log %13 : vector<1x1x256xf32>
    %15 = arith.addf %14, %8 : vector<1x1x256xf32>
    %16 = arith.mulf %4, %3 : vector<1x4x256xf32>
    %cst_10 = arith.constant dense<0.000000e+00> : vector<1x256xf32>
    %17 = vector.multi_reduction <add>, %16, %cst_10 [1] : vector<1x4x256xf32> to vector<1x256xf32>
    %18 = vector.shape_cast %17 : vector<1x256xf32> to vector<1x1x256xf32>
    %19 = vector.broadcast %6 : vector<1x4x1xf32> to vector<1x4x256xf32>
    %20 = arith.mulf %4, %19 : vector<1x4x256xf32>
    %cst_11 = arith.constant dense<0.000000e+00> : vector<1x256xf32>
    %21 = vector.multi_reduction <add>, %20, %cst_11 [1] : vector<1x4x256xf32> to vector<1x256xf32>
    %22 = vector.shape_cast %21 : vector<1x256xf32> to vector<1x1x256xf32>
    %c0_12 = arith.constant 0 : index
    %c0_13 = arith.constant 0 : index
    %c0_14 = arith.constant 0 : index
    %23 = vector.load %arg7[%c0_12, %c0_13, %c0_14] : memref<1x2x256xf32, #tpu.memory_space<vmem>>, vector<1x1x256xf32>
    %24 = arith.subf %15, %18 : vector<1x1x256xf32>
    %25 = arith.mulf %22, %24 : vector<1x1x256xf32>
    %26 = arith.addf %23, %25 : vector<1x1x256xf32>
    %c0_15 = arith.constant 0 : index
    %c0_16 = arith.constant 0 : index
    %c0_17 = arith.constant 0 : index
    %27 = vector.load %arg7[%c0_15, %c0_16, %c0_17] : memref<1x2x256xf32, #tpu.memory_space<vmem>>, vector<1x1x256xf32>
    tpu.vector_store %arg7[%c0_15, %c0_16, %c0_17], %26 {strides = array<i32>} : memref<1x2x256xf32, #tpu.memory_space<vmem>>, vector<1x1x256xf32>,
    %c0_18 = arith.constant 0 : index
    %c1 = arith.constant 1 : index
    %c0_19 = arith.constant 0 : index
    %28 = vector.load %arg7[%c0_18, %c1, %c0_19] : memref<1x2x256xf32, #tpu.memory_space<vmem>>, vector<1x1x256xf32>
    %29 = arith.addf %28, %22 : vector<1x1x256xf32>
    %c0_20 = arith.constant 0 : index
    %c1_21 = arith.constant 1 : index
    %c0_22 = arith.constant 0 : index
    %30 = vector.load %arg7[%c0_20, %c1_21, %c0_22] : memref<1x2x256xf32, #tpu.memory_space<vmem>>, vector<1x1x256xf32>
    tpu.vector_store %arg7[%c0_20, %c1_21, %c0_22], %29 {strides = array<i32>} : memref<1x2x256xf32, #tpu.memory_space<vmem>>, vector<1x1x256xf32>,
    %c0_i32_23 = arith.constant 0 : i32
    %31 = arith.cmpi eq, %arg2, %c0_i32_23 : i32
    %32 = arith.extui %31 : i1 to i32
    %c0_i32_24 = arith.constant 0 : i32
    %33 = arith.cmpi ne, %32, %c0_i32_24 : i32
    scf.if %33 {
      %c0_25 = arith.constant 0 : index
      %c0_26 = arith.constant 0 : index
      %c0_27 = arith.constant 0 : index
      %34 = vector.load %arg7[%c0_25, %c0_26, %c0_27] : memref<1x2x256xf32, #tpu.memory_space<vmem>>, vector<1x2x256xf32>
      %cst_28 = arith.constant dense<0.000000e+00> : vector<1x2xf32>
      %35 = vector.multi_reduction <add>, %34, %cst_28 [2] : vector<1x2x256xf32> to vector<1x2xf32>
      %36 = vector.shape_cast %35 : vector<1x2xf32> to vector<1x2x1xf32>
      %37 = vector.shape_cast %36 : vector<1x2x1xf32> to vector<1x2x1xf32>
      %38 = vector.broadcast %37 : vector<1x2x1xf32> to vector<1x2x128xf32>
      %c0_29 = arith.constant 0 : index
      %c0_30 = arith.constant 0 : index
      %c0_31 = arith.constant 0 : index
      %39 = vector.load %arg6[%c0_29, %c0_30, %c0_31] : memref<1x2x128xf32, #tpu.memory_space<vmem>>, vector<1x2x128xf32>
      tpu.vector_store %arg6[%c0_29, %c0_30, %c0_31], %38 {strides = array<i32>} : memref<1x2x128xf32, #tpu.memory_space<vmem>>, vector<1x2x128xf32>,
    } else {
    }
    return
  }
  func.func @transform_0(%arg0: i32, %arg1: i32, %arg2: i32) -> (i32, i32, i32) {
    %c0_i32 = arith.constant 0 : i32
    %c0_i32_0 = arith.constant 0 : i32
    %c0_i32_1 = arith.constant 0 : i32
    %c0_i32_2 = arith.constant 0 : i32
    return %c0_i32, %c0_i32_0, %c0_i32_1 : i32, i32, i32
  }
  func.func @transform_1(%arg0: i32, %arg1: i32, %arg2: i32) -> (i32, i32, i32) {
    %c1_i32 = arith.constant 1 : i32
    %0 = arith.muli %arg1, %c1_i32 : i32
    %1 = arith.addi %0, %arg2 : i32
    %c0_i32 = arith.constant 0 : i32
    %c0_i32_0 = arith.constant 0 : i32
    return %arg0, %c0_i32, %1 : i32, i32, i32
  }
  func.func @transform_2(%arg0: i32, %arg1: i32, %arg2: i32) -> (i32, i32, i32) {
    %c1_i32 = arith.constant 1 : i32
    %0 = arith.muli %arg1, %c1_i32 : i32
    %1 = arith.addi %0, %arg2 : i32
    %c0_i32 = arith.constant 0 : i32
    %c0_i32_0 = arith.constant 0 : i32
    return %arg0, %c0_i32, %1 : i32, i32, i32
  }
  func.func @transform_3(%arg0: i32, %arg1: i32, %arg2: i32) -> (i32, i32, i32) {
    %c1_i32 = arith.constant 1 : i32
    %0 = arith.muli %arg0, %c1_i32 : i32
    %1 = arith.addi %0, %arg1 : i32
    %c0_i32 = arith.constant 0 : i32
    %c0_i32_0 = arith.constant 0 : i32
    %c0_i32_1 = arith.constant 0 : i32
    return %1, %c0_i32, %c0_i32_0 : i32, i32, i32
  }
}

</mosaic_0001>

<llo_original>
// kernel: unet_loss_with_angle.1
$region0: #{unet_loss_with_angle.1}
  #allocation0 [shape = 'u32[]', space=smem, size = 0x4, offset = 0x4, fixed_abs, tag = 'smem constant byte address 0x4 - core index']
  #allocation1 [shape = 'u32[144,128]{1,0:T(1,128)}', space=vmem, size = 0x12000, scoped, tag = 'internal scratch']
  #allocation2 [shape = 'f32[1,2,256]{2,1,0:T(2,128)}', space=vmem, size = 0x800, scoped, tag = 'scratch operand']
  %s0 = inlined_call_operand.vmem [shape: f32[1,4,128], index: 0, kind: input, shape index: {}]
  %s1 = inlined_call_operand.vmem [shape: f32[2,4,256], index: 1, kind: input, shape index: {}]
  %s2 = inlined_call_operand.vmem [shape: f32[2,4,256], index: 2, kind: input, shape index: {}]
  %s3 = inlined_call_operand.vmem [shape: f32[2,2,128], index: 3, kind: output, shape index: {}]
  %s4 = sld [smem:[#allocation0]]
  $region53: #{unet_loss_with_angle.1} parent=0
    _
  %s6 = ssub.s32 1, %s4
  %s7 = scalar_select 0, %s6, %s4
  loop: start=0, step=1, limit=4
  $region2: #{unet_loss_with_angle.1} parent=0 // loop_pre_header
    _
  $region3: #{unet_loss_with_angle.1} parent=0 // loop_header
    %s9 = sphi 0, %s13
    %p10 = scmp.ge.s32.totalorder %s9, 4
    %s16 = sphi 0, %s35
    %s17 = sphi 0, %s31
    %s18 = sphi 0, %s27
    %s19 = sphi 0, %s16
    %s20 = sphi 0, %s17
    %s21 = sphi 0, %s18
    %s22 = sphi 0, %s19
    %s23 = sphi 0, %s20
    %s24 = sphi 0, %s21
    %s36 = sphi 0, %s36
    %s38 = sphi 0, %s36
    %s39 = sphi 0, %s38
    %s53 = sphi 0, %s39
    %s63 = sphi 0, %s65
    %s66 = sphi 0, %s63
    %s67 = sphi 0, %s66
    %s83 = sphi 0, %s67
    %s93 = sphi 0, %s95
    %s96 = sphi 0, %s93
    %s97 = sphi 0, %s96
    %s113 = sphi 0, %s97
    %s121 = sphi 0, %s123
    %s124 = sphi 0, %s121
    %s125 = sphi 0, %s124
    %s141 = sphi 0, %s125
  $region4: #{unet_loss_with_angle.1} parent=0 // loop_header_branch
    %12 = sbr.rel (%p10) target = $region8
  $region5: #{unet_loss_with_angle.1} parent=0 // loop_body
    %s14 = ssub.s32 %s9, 1
    %s15 = ssub.s32 %s9, 2
    %s25 = sadd.s32 1, %s18
    %p26 = scmp.ge.s32.totalorder %s25, 1
    %s27 = scalar_select %p26, 0, %s25
    %s28 = sadd.s32 1, %s17
    %s29 = scalar_select %p26, %s28, %s17
    %p30 = scmp.ge.s32.totalorder %s29, 1
    %s31 = scalar_select %p30, 0, %s29
    %s32 = sadd.s32 1, %s16
    %s33 = scalar_select %p30, %s32, %s16
    %p34 = scmp.ge.s32.totalorder %s33, 2
    %s35 = scalar_select %p34, 0, %s33
    %s37 = sadd.s32 %s36, 1
    %p40 = scmp.eq.s32.totalorder %s9, 1
    %p41 = scmp.ne.s32.totalorder %s36, %s38
    %p42 = scmp.eq.s32.totalorder %s9, 0
    %p43 = por %p41, %p42
    %p44 = scmp.ne.s32.totalorder %s36, %s38
    %p45 = scmp.eq.s32.totalorder %s14, 1
    %p46 = por %p44, %p45
    %p47 = scmp.ne.s32.totalorder %s38, %s39
    %p48 = scmp.eq.s32.totalorder %s14, 0
    %p49 = por %p47, %p48
    %p50 = scmp.ne.s32.totalorder %s38, %s39
    %p51 = scmp.eq.s32.totalorder %s15, 1
    %p52 = por %p50, %p51
    %p54 = scmp.ne.s32.totalorder %s39, %s53
    %p55 = scmp.eq.s32.totalorder %s15, 0
    %p56 = por %p54, %p55
    %s57 = sadd.s32 %s17, %s18
    %s58 = sadd.s32 %s31, %s27
    %s59 = ssub.s32 %s16, %s35
    %s60 = ssub.s32 %s57, %s58
    %s61 = sor.u32 %s59, %s60
    %p62 = scmp.eq.s32.totalorder %s61, 0
    %s64 = sadd.s32 %s63, 1
    %s65 = scalar_select %p62, %s63, %s64
    %p68 = pneg %p62
    %p69 = scmp.eq.s32.totalorder %s9, 1
    %p70 = por %p68, %p69
    %p71 = scmp.ne.s32.totalorder %s63, %s66
    %p72 = scmp.eq.s32.totalorder %s9, 0
    %p73 = por %p71, %p72
    %p74 = scmp.ne.s32.totalorder %s63, %s66
    %p75 = scmp.eq.s32.totalorder %s14, 1
    %p76 = por %p74, %p75
    %p77 = scmp.ne.s32.totalorder %s66, %s67
    %p78 = scmp.eq.s32.totalorder %s14, 0
    %p79 = por %p77, %p78
    %p80 = scmp.ne.s32.totalorder %s66, %s67
    %p81 = scmp.eq.s32.totalorder %s15, 1
    %p82 = por %p80, %p81
    %p84 = scmp.ne.s32.totalorder %s67, %s83
    %p85 = scmp.eq.s32.totalorder %s15, 0
    %p86 = por %p84, %p85
    %s87 = sadd.s32 %s17, %s18
    %s88 = sadd.s32 %s31, %s27
    %s89 = ssub.s32 %s16, %s35
    %s90 = ssub.s32 %s87, %s88
    %s91 = sor.u32 %s89, %s90
    %p92 = scmp.eq.s32.totalorder %s91, 0
    %s94 = sadd.s32 %s93, 1
    %s95 = scalar_select %p92, %s93, %s94
    %p98 = pneg %p92
    %p99 = scmp.eq.s32.totalorder %s9, 1
    %p100 = por %p98, %p99
    %p101 = scmp.ne.s32.totalorder %s93, %s96
    %p102 = scmp.eq.s32.totalorder %s9, 0
    %p103 = por %p101, %p102
    %p104 = scmp.ne.s32.totalorder %s93, %s96
    %p105 = scmp.eq.s32.totalorder %s14, 1
    %p106 = por %p104, %p105
    %p107 = scmp.ne.s32.totalorder %s96, %s97
    %p108 = scmp.eq.s32.totalorder %s14, 0
    %p109 = por %p107, %p108
    %p110 = scmp.ne.s32.totalorder %s96, %s97
    %p111 = scmp.eq.s32.totalorder %s15, 1
    %p112 = por %p110, %p111
    %p114 = scmp.ne.s32.totalorder %s97, %s113
    %p115 = scmp.eq.s32.totalorder %s15, 0
    %p116 = por %p114, %p115
    %s117 = sadd.s32 %s16, %s17
    %s118 = sadd.s32 %s35, %s31
    %s119 = ssub.s32 %s117, %s118
    %p120 = scmp.eq.s32.totalorder %s119, 0
    %s122 = sadd.s32 %s121, 1
    %s123 = scalar_select %p120, %s121, %s122
    %p126 = pneg %p120
    %p127 = scmp.eq.s32.totalorder %s9, 1
    %p128 = por %p126, %p127
    %p129 = scmp.ne.s32.totalorder %s121, %s124
    %p130 = scmp.eq.s32.totalorder %s9, 0
    %p131 = por %p129, %p130
    %p132 = scmp.ne.s32.totalorder %s121, %s124
    %p133 = scmp.eq.s32.totalorder %s14, 1
    %p134 = por %p132, %p133
    %p135 = scmp.ne.s32.totalorder %s124, %s125
    %p136 = scmp.eq.s32.totalorder %s14, 0
    %p137 = por %p135, %p136
    %p138 = scmp.ne.s32.totalorder %s124, %s125
    %p139 = scmp.eq.s32.totalorder %s15, 1
    %p140 = por %p138, %p139
    %p142 = scmp.ne.s32.totalorder %s125, %s141
    %p143 = scmp.eq.s32.totalorder %s15, 0
    %p144 = por %p142, %p143
    %p145 = scmp.le.s32.totalorder 1, %s9
    %p146 = scmp.lt.s32.totalorder %s9, 3
    %p147 = pnand %p145, %p146
    %p148 = pneg %p147
    // Predicated region
    $region9: #{unet_loss_with_angle.1} parent=5 // pred_check
      _
    $region10: #{unet_loss_with_angle.1} parent=5 // pred_check_branch
      %150 = sbr.rel (%p147) target = $region12
    $region11: #{unet_loss_with_angle.1} parent=5 // pred_region
      %s151 = ssub.s32 %s9, 1
      // Predicated region
      $region13: #{unet_loss_with_angle.1} parent=11 // pred_check
        %p152 = pneg %p49
      $region14: #{unet_loss_with_angle.1} parent=11 // pred_check_branch
        %154 = sbr.rel (%p152) target = $region16
      $region15: #{unet_loss_with_angle.1} parent=11 // pred_region
        _
      $region16: #{unet_loss_with_angle.1} parent=11 // pred_fallthru
        _
    $region12: #{unet_loss_with_angle.1} parent=5 // pred_fallthru
      _
    %p155 = scmp.lt.s32.totalorder %s9, 2
    // Predicated region
    $region17: #{unet_loss_with_angle.1} parent=5 // pred_check
      %p156 = pneg %p155
    $region18: #{unet_loss_with_angle.1} parent=5 // pred_check_branch
      %158 = sbr.rel (%p156) target = $region20
    $region19: #{unet_loss_with_angle.1} parent=5 // pred_region
      // Predicated region
      $region21: #{unet_loss_with_angle.1} parent=19 // pred_check
        %p159 = pneg %p73
      $region22: #{unet_loss_with_angle.1} parent=19 // pred_check_branch
        %161 = sbr.rel (%p159) target = $region24
      $region23: #{unet_loss_with_angle.1} parent=19 // pred_region
        %s162 = sadd.s32 %s17, %s18
        %s163 = smul.u32 2, %s162
        %p164 = scmp.lt.s32.totalorder %s16, 1
        %s165 = scalar_select %p164, %s16, 1
        %p166 = scmp.lt.s32.totalorder %s163, 1
        %s167 = scalar_select %p166, %s163, 1
        %s168 = smul.addr %s165, 2
        %s169 = sadd.s32 %s167, %s168
        %s170 = smul.addr %s169, 4
        %s171 = scalar_lea.vmem %s1, %s170
        %s172 = sadd.s32 %s17, %s18
        %s173 = smul.u32 2, %s172
      $region24: #{unet_loss_with_angle.1} parent=19 // pred_fallthru
        _
      // Predicated region
      $region25: #{unet_loss_with_angle.1} parent=19 // pred_check
        %p174 = pneg %p103
      $region26: #{unet_loss_with_angle.1} parent=19 // pred_check_branch
        %176 = sbr.rel (%p174) target = $region28
      $region27: #{unet_loss_with_angle.1} parent=19 // pred_region
        %s177 = sadd.s32 %s17, %s18
        %s178 = smul.u32 2, %s177
        %p179 = scmp.lt.s32.totalorder %s16, 1
        %s180 = scalar_select %p179, %s16, 1
        %p181 = scmp.lt.s32.totalorder %s178, 1
        %s182 = scalar_select %p181, %s178, 1
        %s183 = smul.addr %s180, 2
        %s184 = sadd.s32 %s182, %s183
        %s185 = smul.addr %s184, 4
        %s186 = scalar_lea.vmem %s2, %s185
        %s187 = sadd.s32 %s17, %s18
        %s188 = smul.u32 2, %s187
      $region28: #{unet_loss_with_angle.1} parent=19 // pred_fallthru
        _
    $region20: #{unet_loss_with_angle.1} parent=5 // pred_fallthru
      _
    %p189 = scmp.le.s32.totalorder 1, %s9
    %p190 = scmp.lt.s32.totalorder %s9, 3
    %p191 = pnand %p189, %p190
    %p192 = pneg %p191
    // Predicated region
    $region29: #{unet_loss_with_angle.1} parent=5 // pred_check
      _
    $region30: #{unet_loss_with_angle.1} parent=5 // pred_check_branch
      %194 = sbr.rel (%p191) target = $region32
    $region31: #{unet_loss_with_angle.1} parent=5 // pred_region
      %s195 = ssub.s32 %s9, 1
      %p196 = pneg %p49
      %p197 = pneg %p46
      %s198 = sadd.s32 %s20, %s21
      %s199 = smul.u32 2, %s198
      %p200 = scmp.lt.s32.totalorder %s19, 1
      %s201 = scalar_select %p200, %s19, 1
      %p202 = scmp.lt.s32.totalorder %s199, 1
      %s203 = scalar_select %p202, %s199, 1
      %s204 = smul.addr %s201, 2
      %s205 = sadd.s32 %s203, %s204
      %s206 = smul.addr %s205, 4
      %s207 = scalar_lea.vmem %s1, %s206
      %p208 = pneg %p79
      %p209 = pneg %p76
      %s210 = sadd.s32 %s20, %s21
      %s211 = smul.u32 2, %s210
      %p212 = scmp.lt.s32.totalorder %s19, 1
      %s213 = scalar_select %p212, %s19, 1
      %p214 = scmp.lt.s32.totalorder %s211, 1
      %s215 = scalar_select %p214, %s211, 1
      %s216 = smul.addr %s213, 2
      %s217 = sadd.s32 %s215, %s216
      %s218 = smul.addr %s217, 4
      %s219 = scalar_lea.vmem %s2, %s218
      %p220 = pneg %p109
      %p221 = pneg %p106
      %p222 = pneg %p137
      %p223 = pneg %p134
      %s224 = sadd.s32 %s19, %s20
      %p225 = scmp.lt.s32.totalorder %s224, 1
      %s226 = scalar_select %p225, %s224, 1
      %s227 = smul.addr %s226, 2
      %s228 = scalar_lea.vmem %s3, %s227
      %s229 = sadd.s32 %s20, %s21
      %s230 = smul.u32 2, %s229
      %p231 = scmp.lt.s32.totalorder %s19, 1
      %s232 = scalar_select %p231, %s19, 1
      %p233 = scmp.lt.s32.totalorder %s230, 1
      %s234 = scalar_select %p233, %s230, 1
      %s235 = smul.addr %s232, 2
      %s236 = sadd.s32 %s234, %s235
      %s237 = smul.addr %s236, 4
      %s238 = scalar_lea.vmem %s1, %s237
      %s239 = sadd.s32 %s20, %s21
      %s240 = smul.u32 2, %s239
      %s241 = sadd.s32 %s20, %s21
      %s242 = smul.u32 2, %s241
      %p243 = scmp.lt.s32.totalorder %s19, 1
      %s244 = scalar_select %p243, %s19, 1
      %p245 = scmp.lt.s32.totalorder %s242, 1
      %s246 = scalar_select %p245, %s242, 1
      %s247 = smul.addr %s244, 2
      %s248 = sadd.s32 %s246, %s247
      %s249 = smul.addr %s248, 4
      %s250 = scalar_lea.vmem %s2, %s249
      %s251 = sadd.s32 %s20, %s21
      %s252 = smul.u32 2, %s251
      %s253 = sadd.s32 %s19, %s20
      %p254 = scmp.lt.s32.totalorder %s253, 1
      %s255 = scalar_select %p254, %s253, 1
      %s256 = smul.addr %s255, 2
      %s257 = scalar_lea.vmem %s3, %s256
      %s258 = sadd.s32 %s19, %s20
      %p259 = scmp.eq.s32.totalorder %s21, 0
      // Predicated region
      $region33: #{unet_loss_with_angle.1} parent=31 // pred_check
        %p260 = pneg %p259
      $region34: #{unet_loss_with_angle.1} parent=31 // pred_check_branch
        %262 = sbr.rel (%p260) target = $region36
      $region35: #{unet_loss_with_angle.1} parent=31 // pred_region
        %263 = vst [vmem:[#allocation2] sm:$0xf] 0.0
      $region36: #{unet_loss_with_angle.1} parent=31 // pred_fallthru
        _
      %v264 = vld [vmem:[%s238] sm:$0xff]
      %v265 = vld [vmem:[%s250] sm:$0xff]
      %v266 = vld [vmem:[%s0] sm:$0xf]
      %v268 = vcombine.high %v264, %v264
      %vm270 = vcmask 1043456
      %v271 = vsel %vm270, %v264, -inf
      %v272 = vrot.slane %v271, 4
      %v273 = vmax.f32 %v271, %v272
      %v274 = vrot.slane %v273, 2
      %v275 = vmax.f32 %v273, %v274
      %v276 = vrot.slane %v275, 1
      %v277 = vmax.f32 %v275, %v276
      %v278 = vsel %vm270, %v268, -inf
      %v279 = vrot.slane %v278, 4
      %v280 = vmax.f32 %v278, %v279
      %v281 = vrot.slane %v280, 2
      %v282 = vmax.f32 %v280, %v281
      %v283 = vrot.slane %v282, 1
      %v284 = vmax.f32 %v282, %v283
      %v287 = vcombine.low %v277, %v284
      %v289 = vsub.f32 %v264, %v287
      %v290 = vmul.f32 %v289, 1.442695
      %v291 = vpow.pop %v290
      %v293 = vcombine.high %v291, %v291
      %v295 = vsel %vm270, %v291, 0.0
      %v296 = vrot.slane %v295, 4
      %v297 = vadd.f32 %v295, %v296
      %v298 = vrot.slane %v297, 2
      %v299 = vadd.f32 %v297, %v298
      %v300 = vrot.slane %v299, 1
      %v301 = vadd.f32 %v299, %v300
      %v302 = vsel %vm270, %v293, 0.0
      %v303 = vrot.slane %v302, 4
      %v304 = vadd.f32 %v302, %v303
      %v305 = vrot.slane %v304, 2
      %v306 = vadd.f32 %v304, %v305
      %v307 = vrot.slane %v306, 1
      %v308 = vadd.f32 %v306, %v307
      %v309 = vlog2.pop %v301
      %v310 = vmul.f32 %v309, 0.6931472
      %v311 = vlog2.pop %v308
      %v312 = vmul.f32 %v311, 0.6931472
      %v313 = vadd.f32 %v310, %v277
      %v314 = vadd.f32 %v312, %v284
      %v315 = vmul.f32 %v265, %v264
      %v317 = vcombine.high %v315, %v315
      %v319 = vsel %vm270, %v315, 0.0
      %v320 = vrot.slane %v319, 4
      %v321 = vadd.f32 %v319, %v320
      %v322 = vrot.slane %v321, 2
      %v323 = vadd.f32 %v321, %v322
      %v324 = vrot.slane %v323, 1
      %v325 = vadd.f32 %v323, %v324
      %v326 = vsel %vm270, %v317, 0.0
      %v327 = vrot.slane %v326, 4
      %v328 = vadd.f32 %v326, %v327
      %v329 = vrot.slane %v328, 2
      %v330 = vadd.f32 %v328, %v329
      %v331 = vrot.slane %v330, 1
      %v332 = vadd.f32 %v330, %v331
      %334 = vset.pattern.permute.xlu0 0
      %335 = vperm.xlu0 %334, %v266
      %v336 = vpop.permute.xlu0 %335
      %v338 = vunpack.c.l.s4 839922192
      %v339 = vunpack.c.0.s8 %v338
      %v340 = vlaneseq
      %v341 = vshrl.u32 %v340, 7
      %v342 = vsub.s32 %v339, %v341
      %v343 = vrot.slane %v336, %v342
      %v345 = vmul.f32 %v265, %v343
      %v347 = vcombine.high %v345, %v345
      %v349 = vsel %vm270, %v345, 0.0
      %v350 = vrot.slane %v349, 4
      %v351 = vadd.f32 %v349, %v350
      %v352 = vrot.slane %v351, 2
      %v353 = vadd.f32 %v351, %v352
      %v354 = vrot.slane %v353, 1
      %v355 = vadd.f32 %v353, %v354
      %v356 = vsel %vm270, %v347, 0.0
      %v357 = vrot.slane %v356, 4
      %v358 = vadd.f32 %v356, %v357
      %v359 = vrot.slane %v358, 2
      %v360 = vadd.f32 %v358, %v359
      %v361 = vrot.slane %v360, 1
      %v362 = vadd.f32 %v360, %v361
      %v363 = vld [vmem:[#allocation2] ss:$2 sm:$0x3]
      %v364 = vsub.f32 %v313, %v325
      %v365 = vsub.f32 %v314, %v332
      %v366 = vmul.f32 %v355, %v364
      %v367 = vmul.f32 %v362, %v365
      %v370 = vcombine.low %v366, %v367
      %v372 = vunpack.c.l.s4 1966171168
      %v373 = vunpack.c.0.s8 %v372
      %v374 = vlaneseq
      %v375 = vshrl.u32 %v374, 7
      %v376 = vsub.s32 %v373, %v375
      %v377 = vrot.slane %v370, %v376
      %v379 = vunpack.c.l.s4 1966171168
      %v380 = vunpack.c.0.s8 %v379
      %v381 = vlaneseq
      %v382 = vshrl.u32 %v381, 7
      %v383 = vsub.s32 %v380, %v382
      %v384 = vrot.slane %v377, %v383
      %v386 = vadd.f32 %v363, %v384
      %v387 = vlaneseq
      %vm388 = vcmp.ge.s32.totalorder %v387, 0
      %vm389 = vcmp.lt.s32.totalorder %v387, 256
      %vm390 = vmand %vm388, %vm389
      %391 = vst.msk [vmem:[#allocation2] ss:$2 sm:$0x3] %vm390, %v386
      %s392 = scalar_lea.vmem [#allocation2], 1
      %v393 = vld [vmem:[%s392] ss:$2 sm:$0x3]
      %v396 = vcombine.low %v355, %v362
      %v398 = vunpack.c.l.s4 1966171168
      %v399 = vunpack.c.0.s8 %v398
      %v400 = vlaneseq
      %v401 = vshrl.u32 %v400, 7
      %v402 = vsub.s32 %v399, %v401
      %v403 = vrot.slane %v396, %v402
      %v405 = vunpack.c.l.s4 1966171168
      %v406 = vunpack.c.0.s8 %v405
      %v407 = vlaneseq
      %v408 = vshrl.u32 %v407, 7
      %v409 = vsub.s32 %v406, %v408
      %v410 = vrot.slane %v403, %v409
      %v412 = vadd.f32 %v393, %v410
      %413 = vst.msk [vmem:[%s392] ss:$2 sm:$0x3] %vm390, %v412
      // Predicated region
      $region37: #{unet_loss_with_angle.1} parent=31 // pred_check
        %p414 = pneg %p259
      $region38: #{unet_loss_with_angle.1} parent=31 // pred_check_branch
        %416 = sbr.rel (%p414) target = $region40
      $region39: #{unet_loss_with_angle.1} parent=31 // pred_region
        %v417 = vld [vmem:[#allocation2] sm:$0xf]
        %v420 = vunpack.c.l.s4 1983009808
        %v421 = vunpack.c.0.s8 %v420
        %v422 = vlaneseq
        %v423 = vshrl.u32 %v422, 7
        %v424 = vsub.s32 %v421, %v423
        %v425 = vrot.slane %v417, %v424
        %v426 = vcombine.high %v425, %v425
        %vm429 = vcmask 1041408
        %v430 = vsel %vm429, %v425, 0.0
        %v431 = vsel %vm429, %v426, 0.0
        %v432 = vadd.f32 %v430, %v431
        %433 = vadd.xlane.f32.xlu0 %v432
        %v434 = vpop.xlane.xlu0 %433
        %435 = vst [vmem:[%s257] sm:$0x3] %v434
      $region40: #{unet_loss_with_angle.1} parent=31 // pred_fallthru
        _
      %s436 = sadd.s32 %s19, %s20
      %p437 = scmp.lt.s32.totalorder %s436, 1
      %s438 = scalar_select %p437, %s436, 1
      %s439 = smul.addr %s438, 2
      %s440 = scalar_lea.vmem %s3, %s439
      // Predicated region
      $region41: #{unet_loss_with_angle.1} parent=31 // pred_check
        %p441 = pneg %p134
      $region42: #{unet_loss_with_angle.1} parent=31 // pred_check_branch
        %443 = sbr.rel (%p441) target = $region44
      $region43: #{unet_loss_with_angle.1} parent=31 // pred_region
        %s444 = sadd.s32 %s19, %s20
      $region44: #{unet_loss_with_angle.1} parent=31 // pred_fallthru
        _
    $region32: #{unet_loss_with_angle.1} parent=5 // pred_fallthru
      _
    %p445 = scmp.le.s32.totalorder 2, %s9
    // Predicated region
    $region45: #{unet_loss_with_angle.1} parent=5 // pred_check
      %p446 = pneg %p445
    $region46: #{unet_loss_with_angle.1} parent=5 // pred_check_branch
      %448 = sbr.rel (%p446) target = $region48
    $region47: #{unet_loss_with_angle.1} parent=5 // pred_region
      %s449 = ssub.s32 %s9, 2
      // Predicated region
      $region49: #{unet_loss_with_angle.1} parent=47 // pred_check
        %p450 = pneg %p140
      $region50: #{unet_loss_with_angle.1} parent=47 // pred_check_branch
        %452 = sbr.rel (%p450) target = $region52
      $region51: #{unet_loss_with_angle.1} parent=47 // pred_region
        %s453 = sadd.s32 %s22, %s23
        %p454 = scmp.lt.s32.totalorder %s453, 1
        %s455 = scalar_select %p454, %s453, 1
        %s456 = smul.addr %s455, 2
        %s457 = scalar_lea.vmem %s3, %s456
      $region52: #{unet_loss_with_angle.1} parent=47 // pred_fallthru
        _
    $region48: #{unet_loss_with_angle.1} parent=5 // pred_fallthru
      _
  $region6: #{unet_loss_with_angle.1} parent=0 // loop_footer
    %s13 = sadd.s32 1, %s9
  $region7: #{unet_loss_with_angle.1} parent=0 // loop_footer_branch
    %8 = sbr.rel target = $region3
  $region8: #{unet_loss_with_angle.1} parent=0 // loop_exit
    _

</llo_original>
